<compile_context>
chip_gen: v7x
topology: tpu7x:2x2x1
jax: 0.10.0
libtpu: 0.0.40
codegen_flags: <defaults>
</compile_context>

<pallas_src>
import functools

import jax
import jax.numpy as jnp
import numpy as np
from jax.experimental import pallas as pl
from jax.experimental.pallas import tpu as pltpu


def _hnn_kernel(x_ref, w1_ref, b1_ref, w2s_ref, w1m_ref, o_ref):
    """Fused HNN step for one (TB, in_dim) batch tile.

    x_ref  : (TB, in_dim)      state tile (q, p)
    w1_ref : (hidden, in_dim)  lin1 weight, PyTorch layout (VMEM-resident)
    b1_ref : (1, hidden)       lin1 bias row
    w2s_ref: (1, hidden)       sum over output units of lin2 weight
    w1m_ref: (hidden, in_dim)  W1 @ M^T  (grad projection + symplectic rotation)
    o_ref  : (TB, in_dim)      dx/dt tile
    """
    x = x_ref[...]

    # z = x @ W1^T + b1 : contract dim 1 of x with dim 1 of W1 (MXU consumes
    # the transposed RHS directly -- no transpose copy anywhere).
    z = jax.lax.dot_general(
        x, w1_ref[...], dimension_numbers=(((1,), (1,)), ((), ())),
        preferred_element_type=jnp.float32)
    z = z + b1_ref[...]                                    # (TB, hidden)
    th = jnp.tanh(z)                                       # EUP

    # Analytic dH/dx summed over Hamiltonian outputs (b2 vanishes), with the
    # symplectic rotation already folded into the projection weight:
    #   dx/dt = (tanh'(z) * sum_o W2[o,:]) @ (W1 @ M^T)
    g = (1.0 - th * th) * w2s_ref[...]                     # (TB, hidden)
    o_ref[...] = jax.lax.dot_general(
        g, w1m_ref[...], dimension_numbers=(((1,), (0,)), ((), ())),
        preferred_element_type=jnp.float32).astype(o_ref.dtype)


@functools.partial(jax.jit, static_argnames=("block_rows",))
def hamiltonian_nn_forward(t, x, w1, b1, w2, m, *, block_rows=512):
    """HNN forward: dx/dt = (dH/dx) @ M^T.

    Args:
      t:   unused (API parity with the PyTorch forward) -- NOT passed to Pallas.
      x:   (B, in_dim) float32 state (q, p).
      w1:  (hidden, in_dim)   lin1 weight, PyTorch layout.
      b1:  (hidden,)          lin1 bias.
      w2:  (out_dim, hidden)  lin2 weight, PyTorch layout (b2 not needed).
      m:   (in_dim, in_dim)   permutation tensor M.
      block_rows: batch tile size (multiple of 8).
    Returns:
      (B, in_dim) float32 dx/dt.
    """
    del t  # unused by the forward pass

    B, in_dim = x.shape
    hidden = w1.shape[0]

    # Tiny one-time trace-level ops (no per-tile cost inside the kernel):
    w2_sum = jnp.sum(w2, axis=0, keepdims=True)            # (1, hidden)
    b1_row = b1.reshape(1, hidden)                         # (1, hidden)
    w1_m = jnp.dot(w1, m.T)                                # (hidden, in_dim)

    tb = min(block_rows, B)
    if tb < B:
        assert tb % 8 == 0, "block_rows must be a multiple of 8"
    grid = (pl.cdiv(B, tb),)

    resident = lambda i: (0, 0)  # weights/bias: DMA'd once, stay VMEM-resident

    return pl.pallas_call(
        _hnn_kernel,
        out_shape=jax.ShapeDtypeStruct((B, in_dim), x.dtype),
        grid=grid,
        in_specs=[
            pl.BlockSpec((tb, in_dim), lambda i: (i, 0)),       # x tile
            pl.BlockSpec((hidden, in_dim), resident),           # W1
            pl.BlockSpec((1, hidden), resident),                # b1
            pl.BlockSpec((1, hidden), resident),                # sum_o W2
            pl.BlockSpec((hidden, in_dim), resident),           # W1 @ M^T
        ],
        out_specs=pl.BlockSpec((tb, in_dim), lambda i: (i, 0)),
        compiler_params=pltpu.CompilerParams(
            dimension_semantics=("parallel",)),                 # v7x: 2 TCs share batch
    )(x, w1, b1_row, w2_sum, w1_m)


# ----------------------------- setup helpers -------------------------------

def permutation_tensor(n, assume_canonical_coords=True):
    """Matches HamiltonianNeuralNetwork.permutation_tensor (numpy, trace-time)."""
    if assume_canonical_coords:
        eye = np.eye(n, dtype=np.float32)
        M = np.concatenate([eye[n // 2:], -eye[:n // 2]], axis=0)
    else:
        M = np.ones((n, n), dtype=np.float32)
        M *= 1.0 - np.eye(n, dtype=np.float32)
        M[::2] *= -1.0
        M[:, ::2] *= -1.0
        for i in range(n):
            for j in range(i + 1, n):
                M[i, j] *= -1.0
    return M


def _orthogonal(key, shape, dtype=jnp.float32):
    """Deterministic orthogonal init (torch.nn.init.orthogonal_ semantics)."""
    rows, cols = shape
    n, m = max(rows, cols), min(rows, cols)
    a = jax.random.normal(key, (n, m), dtype)
    q, r = jnp.linalg.qr(a)
    q = q * jnp.sign(jnp.diagonal(r))
    if rows >= cols:
        return q.astype(dtype)
    return q.T.astype(dtype)


def init_params(key, in_dim, hidden_dim, out_dim, last_layer_bias=True):
    k1, k2, k3, k4 = jax.random.split(key, 4)
    w1 = _orthogonal(k1, (hidden_dim, in_dim))
    w2 = _orthogonal(k2, (out_dim, hidden_dim))
    bound1 = 1.0 / jnp.sqrt(in_dim)
    b1 = jax.random.uniform(k3, (hidden_dim,), jnp.float32, -bound1, bound1)
    if last_layer_bias:
        bound2 = 1.0 / jnp.sqrt(hidden_dim)
        b2 = jax.random.uniform(k4, (out_dim,), jnp.float32, -bound2, bound2)
    else:
        b2 = jnp.zeros((out_dim,), jnp.float32)
    return w1, b1, w2, b2


if __name__ == "__main__":
    key = jax.random.PRNGKey(0)
    kx, kp = jax.random.split(key)

    # Small shapes: in_dim = 16 (q,p of dim 8 each), scalar Hamiltonian.
    batch, in_dim, hidden_dim, out_dim = 256, 16, 32, 1
    x = jax.random.normal(kx, (batch, in_dim), jnp.float32)
    t = jnp.float32(0.0)  # unused by the forward pass

    w1, b1, w2, b2 = init_params(kp, in_dim, hidden_dim, out_dim,
                                 last_layer_bias=True)
    M = jnp.asarray(permutation_tensor(in_dim, assume_canonical_coords=True))

    # block_rows=64 -> grid of 4 batch tiles (exercises the pipeline).
    y = hamiltonian_nn_forward(t, x, w1, b1, w2, M, block_rows=64)
    y = jax.block_until_ready(y)

    # Pure-JAX reference: autodiff of the Hamiltonian, then @ M^T
    # (validates the in-kernel analytic gradient + folded rotation).
    def ham_sum(xx):
        return jnp.sum(jnp.tanh(xx @ w1.T + b1) @ w2.T + b2)

    dh_ref = jax.grad(ham_sum)(x)
    ref = dh_ref @ M.T

    assert y.shape == (batch, in_dim)
    assert jnp.allclose(y, ref, atol=1e-4, rtol=1e-4)

    print("KERNEL_OK")
</pallas_src>

<mosaic_0001>
module attributes {stable_mosaic.version = 11 : i64} {
  func.func @_hnn_kernel(%arg0: i32, %arg1: memref<64x16xf32, #tpu.memory_space<vmem>>, %arg2: memref<32x16xf32, #tpu.memory_space<vmem>>, %arg3: memref<1x32xf32, #tpu.memory_space<vmem>>, %arg4: memref<1x32xf32, #tpu.memory_space<vmem>>, %arg5: memref<32x16xf32, #tpu.memory_space<vmem>>, %arg6: memref<64x16xf32, #tpu.memory_space<vmem>>) attributes {dimension_semantics = [#tpu.dimension_semantics<parallel>], iteration_bounds = array<i64: 4>, scalar_prefetch = 0 : i64, scratch_operands = 0 : i64, tpu.core_type = #tpu.core_type<tc>, window_params = [{transform_indices = @transform_0, window_bounds = array<i64: 64, 16>}, {pipeline_mode = #tpu.pipeline_mode<synchronous>, transform_indices = @transform_1, window_bounds = array<i64: 32, 16>}, {pipeline_mode = #tpu.pipeline_mode<synchronous>, transform_indices = @transform_2, window_bounds = array<i64: 1, 32>}, {pipeline_mode = #tpu.pipeline_mode<synchronous>, transform_indices = @transform_3, window_bounds = array<i64: 1, 32>}, {pipeline_mode = #tpu.pipeline_mode<synchronous>, transform_indices = @transform_4, window_bounds = array<i64: 32, 16>}, {transform_indices = @transform_5, window_bounds = array<i64: 64, 16>}]} {
    %c0 = arith.constant 0 : index
    %c0_0 = arith.constant 0 : index
    %0 = vector.load %arg1[%c0, %c0_0] : memref<64x16xf32, #tpu.memory_space<vmem>>, vector<64x16xf32>
    %c0_1 = arith.constant 0 : index
    %c0_2 = arith.constant 0 : index
    %1 = vector.load %arg2[%c0_1, %c0_2] : memref<32x16xf32, #tpu.memory_space<vmem>>, vector<32x16xf32>
    %cst = arith.constant dense<0.000000e+00> : vector<64x32xf32>
    %2 = tpu.matmul %0, %1, %cst {dimension_numbers = #tpu.dot_dimension_numbers<[1], [1], [0], [0], [0, 0, 1, 0], [], []>} : vector<64x16xf32>, vector<32x16xf32>, vector<64x32xf32> -> vector<64x32xf32>
    %c0_3 = arith.constant 0 : index
    %c0_4 = arith.constant 0 : index
    %3 = vector.load %arg3[%c0_3, %c0_4] : memref<1x32xf32, #tpu.memory_space<vmem>>, vector<1x32xf32>
    %4 = vector.broadcast %3 : vector<1x32xf32> to vector<64x32xf32>
    %5 = arith.addf %2, %4 : vector<64x32xf32>
    %6 = math.tanh %5 : vector<64x32xf32>
    %7 = arith.mulf %6, %6 : vector<64x32xf32>
    %cst_5 = arith.constant 1.000000e+00 : f32
    %8 = vector.broadcast %cst_5 : f32 to vector<64x32xf32>
    %9 = arith.subf %8, %7 : vector<64x32xf32>
    %c0_6 = arith.constant 0 : index
    %c0_7 = arith.constant 0 : index
    %10 = vector.load %arg4[%c0_6, %c0_7] : memref<1x32xf32, #tpu.memory_space<vmem>>, vector<1x32xf32>
    %11 = vector.broadcast %10 : vector<1x32xf32> to vector<64x32xf32>
    %12 = arith.mulf %9, %11 : vector<64x32xf32>
    %c0_8 = arith.constant 0 : index
    %c0_9 = arith.constant 0 : index
    %13 = vector.load %arg5[%c0_8, %c0_9] : memref<32x16xf32, #tpu.memory_space<vmem>>, vector<32x16xf32>
    %cst_10 = arith.constant dense<0.000000e+00> : vector<64x16xf32>
    %14 = tpu.matmul %12, %13, %cst_10 {dimension_numbers = #tpu.dot_dimension_numbers<[1], [0], [0], [1], [0, 0, 1, 1], [], []>} : vector<64x32xf32>, vector<32x16xf32>, vector<64x16xf32> -> vector<64x16xf32>
    %c0_11 = arith.constant 0 : index
    %c0_12 = arith.constant 0 : index
    %15 = vector.load %arg6[%c0_11, %c0_12] : memref<64x16xf32, #tpu.memory_space<vmem>>, vector<64x16xf32>
    tpu.vector_store %arg6[%c0_11, %c0_12], %14 {strides = array<i32>} : memref<64x16xf32, #tpu.memory_space<vmem>>, vector<64x16xf32>,
    return
  }
  func.func @transform_0(%arg0: i32) -> (i32, i32) {
    %c0_i32 = arith.constant 0 : i32
    %c0_i32_0 = arith.constant 0 : i32
    return %arg0, %c0_i32 : i32, i32
  }
  func.func @transform_1(%arg0: i32) -> (i32, i32) {
    %c0_i32 = arith.constant 0 : i32
    %c0_i32_0 = arith.constant 0 : i32
    %c0_i32_1 = arith.constant 0 : i32
    return %c0_i32, %c0_i32_0 : i32, i32
  }
  func.func @transform_2(%arg0: i32) -> (i32, i32) {
    %c0_i32 = arith.constant 0 : i32
    %c0_i32_0 = arith.constant 0 : i32
    %c0_i32_1 = arith.constant 0 : i32
    return %c0_i32, %c0_i32_0 : i32, i32
  }
  func.func @transform_3(%arg0: i32) -> (i32, i32) {
    %c0_i32 = arith.constant 0 : i32
    %c0_i32_0 = arith.constant 0 : i32
    %c0_i32_1 = arith.constant 0 : i32
    return %c0_i32, %c0_i32_0 : i32, i32
  }
  func.func @transform_4(%arg0: i32) -> (i32, i32) {
    %c0_i32 = arith.constant 0 : i32
    %c0_i32_0 = arith.constant 0 : i32
    %c0_i32_1 = arith.constant 0 : i32
    return %c0_i32, %c0_i32_0 : i32, i32
  }
  func.func @transform_5(%arg0: i32) -> (i32, i32) {
    %c0_i32 = arith.constant 0 : i32
    %c0_i32_0 = arith.constant 0 : i32
    return %arg0, %c0_i32 : i32, i32
  }
}

</mosaic_0001>

<llo_original>
// kernel: hamiltonian_nn_forward.1
$region0: #{hamiltonian_nn_forward.1}
  #allocation0 [shape = 'u32[]', space=smem, size = 0x4, offset = 0x4, fixed_abs, tag = 'smem constant byte address 0x4 - core index']
  #allocation1 [shape = 'u32[144,128]{1,0:T(1,128)}', space=vmem, size = 0x12000, scoped, tag = 'internal scratch']
  %s0 = inlined_call_operand.vmem [shape: f32[256,16], index: 0, kind: input, shape index: {}]
  %s1 = inlined_call_operand.vmem [shape: f32[32,16], index: 1, kind: input, shape index: {}]
  %s2 = inlined_call_operand.vmem [shape: f32[1,32], index: 2, kind: input, shape index: {}]
  %s3 = inlined_call_operand.vmem [shape: f32[1,32], index: 3, kind: input, shape index: {}]
  %s4 = inlined_call_operand.vmem [shape: f32[32,16], index: 4, kind: input, shape index: {}]
  %s5 = inlined_call_operand.vmem [shape: f32[256,16], index: 5, kind: output, shape index: {}]
  %s6 = sld [smem:[#allocation0]]
  $region53: #{hamiltonian_nn_forward.1} parent=0
    _
  %s8 = ssub.s32 1, %s6
  %s9 = scalar_select 0, %s8, %s6
  loop: start=0, step=1, limit=6
  $region2: #{hamiltonian_nn_forward.1} parent=0 // loop_pre_header
    _
  $region3: #{hamiltonian_nn_forward.1} parent=0 // loop_header
    %s11 = sphi 0, %s15
    %p12 = scmp.ge.s32.totalorder %s11, 6
    %s21 = sphi 0, %s23
    %s24 = sphi 0, %s21
    %s25 = sphi 0, %s24
    %s41 = sphi 0, %s25
    %s45 = sphi 0, %s45
    %s47 = sphi 0, %s45
    %s48 = sphi 0, %s47
    %s62 = sphi 0, %s48
    %s66 = sphi 0, %s66
    %s68 = sphi 0, %s66
    %s69 = sphi 0, %s68
    %s83 = sphi 0, %s69
    %s87 = sphi 0, %s87
    %s89 = sphi 0, %s87
    %s90 = sphi 0, %s89
    %s104 = sphi 0, %s90
    %s108 = sphi 0, %s108
    %s110 = sphi 0, %s108
    %s111 = sphi 0, %s110
    %s125 = sphi 0, %s111
    %s131 = sphi 0, %s133
    %s134 = sphi 0, %s131
    %s135 = sphi 0, %s134
    %s151 = sphi 0, %s135
  $region4: #{hamiltonian_nn_forward.1} parent=0 // loop_header_branch
    %14 = sbr.rel (%p12) target = $region8
  $region5: #{hamiltonian_nn_forward.1} parent=0 // loop_body
    %s16 = ssub.s32 %s11, 1
    %s17 = ssub.s32 %s11, 2
    %s18 = sadd.s32 %s11, 1
    %s19 = ssub.s32 %s11, %s18
    %p20 = scmp.eq.s32.totalorder %s19, 0
    %s22 = sadd.s32 %s21, 1
    %s23 = scalar_select %p20, %s21, %s22
    %p26 = pneg %p20
    %p27 = scmp.eq.s32.totalorder %s11, 3
    %p28 = por %p26, %p27
    %p29 = scmp.ne.s32.totalorder %s21, %s24
    %p30 = scmp.eq.s32.totalorder %s11, 0
    %p31 = por %p29, %p30
    %p32 = scmp.ne.s32.totalorder %s21, %s24
    %p33 = scmp.eq.s32.totalorder %s16, 3
    %p34 = por %p32, %p33
    %p35 = scmp.ne.s32.totalorder %s24, %s25
    %p36 = scmp.eq.s32.totalorder %s16, 0
    %p37 = por %p35, %p36
    %p38 = scmp.ne.s32.totalorder %s24, %s25
    %p39 = scmp.eq.s32.totalorder %s17, 3
    %p40 = por %p38, %p39
    %p42 = scmp.ne.s32.totalorder %s25, %s41
    %p43 = scmp.eq.s32.totalorder %s17, 0
    %p44 = por %p42, %p43
    %s46 = sadd.s32 %s45, 1
    %p49 = scmp.eq.s32.totalorder %s11, 3
    %p50 = scmp.ne.s32.totalorder %s45, %s47
    %p51 = scmp.eq.s32.totalorder %s11, 0
    %p52 = por %p50, %p51
    %p53 = scmp.ne.s32.totalorder %s45, %s47
    %p54 = scmp.eq.s32.totalorder %s16, 3
    %p55 = por %p53, %p54
    %p56 = scmp.ne.s32.totalorder %s47, %s48
    %p57 = scmp.eq.s32.totalorder %s16, 0
    %p58 = por %p56, %p57
    %p59 = scmp.ne.s32.totalorder %s47, %s48
    %p60 = scmp.eq.s32.totalorder %s17, 3
    %p61 = por %p59, %p60
    %p63 = scmp.ne.s32.totalorder %s48, %s62
    %p64 = scmp.eq.s32.totalorder %s17, 0
    %p65 = por %p63, %p64
    %s67 = sadd.s32 %s66, 1
    %p70 = scmp.eq.s32.totalorder %s11, 3
    %p71 = scmp.ne.s32.totalorder %s66, %s68
    %p72 = scmp.eq.s32.totalorder %s11, 0
    %p73 = por %p71, %p72
    %p74 = scmp.ne.s32.totalorder %s66, %s68
    %p75 = scmp.eq.s32.totalorder %s16, 3
    %p76 = por %p74, %p75
    %p77 = scmp.ne.s32.totalorder %s68, %s69
    %p78 = scmp.eq.s32.totalorder %s16, 0
    %p79 = por %p77, %p78
    %p80 = scmp.ne.s32.totalorder %s68, %s69
    %p81 = scmp.eq.s32.totalorder %s17, 3
    %p82 = por %p80, %p81
    %p84 = scmp.ne.s32.totalorder %s69, %s83
    %p85 = scmp.eq.s32.totalorder %s17, 0
    %p86 = por %p84, %p85
    %s88 = sadd.s32 %s87, 1
    %p91 = scmp.eq.s32.totalorder %s11, 3
    %p92 = scmp.ne.s32.totalorder %s87, %s89
    %p93 = scmp.eq.s32.totalorder %s11, 0
    %p94 = por %p92, %p93
    %p95 = scmp.ne.s32.totalorder %s87, %s89
    %p96 = scmp.eq.s32.totalorder %s16, 3
    %p97 = por %p95, %p96
    %p98 = scmp.ne.s32.totalorder %s89, %s90
    %p99 = scmp.eq.s32.totalorder %s16, 0
    %p100 = por %p98, %p99
    %p101 = scmp.ne.s32.totalorder %s89, %s90
    %p102 = scmp.eq.s32.totalorder %s17, 3
    %p103 = por %p101, %p102
    %p105 = scmp.ne.s32.totalorder %s90, %s104
    %p106 = scmp.eq.s32.totalorder %s17, 0
    %p107 = por %p105, %p106
    %s109 = sadd.s32 %s108, 1
    %p112 = scmp.eq.s32.totalorder %s11, 3
    %p113 = scmp.ne.s32.totalorder %s108, %s110
    %p114 = scmp.eq.s32.totalorder %s11, 0
    %p115 = por %p113, %p114
    %p116 = scmp.ne.s32.totalorder %s108, %s110
    %p117 = scmp.eq.s32.totalorder %s16, 3
    %p118 = por %p116, %p117
    %p119 = scmp.ne.s32.totalorder %s110, %s111
    %p120 = scmp.eq.s32.totalorder %s16, 0
    %p121 = por %p119, %p120
    %p122 = scmp.ne.s32.totalorder %s110, %s111
    %p123 = scmp.eq.s32.totalorder %s17, 3
    %p124 = por %p122, %p123
    %p126 = scmp.ne.s32.totalorder %s111, %s125
    %p127 = scmp.eq.s32.totalorder %s17, 0
    %p128 = por %p126, %p127
    %s129 = ssub.s32 %s11, %s18
    %p130 = scmp.eq.s32.totalorder %s129, 0
    %s132 = sadd.s32 %s131, 1
    %s133 = scalar_select %p130, %s131, %s132
    %p136 = pneg %p130
    %p137 = scmp.eq.s32.totalorder %s11, 3
    %p138 = por %p136, %p137
    %p139 = scmp.ne.s32.totalorder %s131, %s134
    %p140 = scmp.eq.s32.totalorder %s11, 0
    %p141 = por %p139, %p140
    %p142 = scmp.ne.s32.totalorder %s131, %s134
    %p143 = scmp.eq.s32.totalorder %s16, 3
    %p144 = por %p142, %p143
    %p145 = scmp.ne.s32.totalorder %s134, %s135
    %p146 = scmp.eq.s32.totalorder %s16, 0
    %p147 = por %p145, %p146
    %p148 = scmp.ne.s32.totalorder %s134, %s135
    %p149 = scmp.eq.s32.totalorder %s17, 3
    %p150 = por %p148, %p149
    %p152 = scmp.ne.s32.totalorder %s135, %s151
    %p153 = scmp.eq.s32.totalorder %s17, 0
    %p154 = por %p152, %p153
    %p155 = scmp.le.s32.totalorder 1, %s11
    %p156 = scmp.lt.s32.totalorder %s11, 5
    %p157 = pnand %p155, %p156
    %p158 = pneg %p157
    // Predicated region
    $region9: #{hamiltonian_nn_forward.1} parent=5 // pred_check
      _
    $region10: #{hamiltonian_nn_forward.1} parent=5 // pred_check_branch
      %160 = sbr.rel (%p157) target = $region12
    $region11: #{hamiltonian_nn_forward.1} parent=5 // pred_region
      %s161 = ssub.s32 %s11, 1
      // Predicated region
      $region13: #{hamiltonian_nn_forward.1} parent=11 // pred_check
        %p162 = pneg %p58
      $region14: #{hamiltonian_nn_forward.1} parent=11 // pred_check_branch
        %164 = sbr.rel (%p162) target = $region16
      $region15: #{hamiltonian_nn_forward.1} parent=11 // pred_region
        _
      $region16: #{hamiltonian_nn_forward.1} parent=11 // pred_fallthru
        _
      // Predicated region
      $region17: #{hamiltonian_nn_forward.1} parent=11 // pred_check
        %p165 = pneg %p79
      $region18: #{hamiltonian_nn_forward.1} parent=11 // pred_check_branch
        %167 = sbr.rel (%p165) target = $region20
      $region19: #{hamiltonian_nn_forward.1} parent=11 // pred_region
        _
      $region20: #{hamiltonian_nn_forward.1} parent=11 // pred_fallthru
        _
      // Predicated region
      $region21: #{hamiltonian_nn_forward.1} parent=11 // pred_check
        %p168 = pneg %p100
      $region22: #{hamiltonian_nn_forward.1} parent=11 // pred_check_branch
        %170 = sbr.rel (%p168) target = $region24
      $region23: #{hamiltonian_nn_forward.1} parent=11 // pred_region
        _
      $region24: #{hamiltonian_nn_forward.1} parent=11 // pred_fallthru
        _
      // Predicated region
      $region25: #{hamiltonian_nn_forward.1} parent=11 // pred_check
        %p171 = pneg %p121
      $region26: #{hamiltonian_nn_forward.1} parent=11 // pred_check_branch
        %173 = sbr.rel (%p171) target = $region28
      $region27: #{hamiltonian_nn_forward.1} parent=11 // pred_region
        _
      $region28: #{hamiltonian_nn_forward.1} parent=11 // pred_fallthru
        _
    $region12: #{hamiltonian_nn_forward.1} parent=5 // pred_fallthru
      _
    %p174 = scmp.lt.s32.totalorder %s11, 4
    // Predicated region
    $region29: #{hamiltonian_nn_forward.1} parent=5 // pred_check
      %p175 = pneg %p174
    $region30: #{hamiltonian_nn_forward.1} parent=5 // pred_check_branch
      %177 = sbr.rel (%p175) target = $region32
    $region31: #{hamiltonian_nn_forward.1} parent=5 // pred_region
      // Predicated region
      $region33: #{hamiltonian_nn_forward.1} parent=31 // pred_check
        %p178 = pneg %p31
      $region34: #{hamiltonian_nn_forward.1} parent=31 // pred_check_branch
        %180 = sbr.rel (%p178) target = $region36
      $region35: #{hamiltonian_nn_forward.1} parent=31 // pred_region
        %s181 = smul.u32 8, %s11
        %p182 = scmp.lt.s32.totalorder %s181, 31
        %s183 = scalar_select %p182, %s181, 31
        %s184 = smul.addr %s183, 8
        %s185 = scalar_lea.vmem %s0, %s184
        %s186 = smul.u32 8, %s11
      $region36: #{hamiltonian_nn_forward.1} parent=31 // pred_fallthru
        _
    $region32: #{hamiltonian_nn_forward.1} parent=5 // pred_fallthru
      _
    %p187 = scmp.le.s32.totalorder 1, %s11
    %p188 = scmp.lt.s32.totalorder %s11, 5
    %p189 = pnand %p187, %p188
    %p190 = pneg %p189
    // Predicated region
    $region37: #{hamiltonian_nn_forward.1} parent=5 // pred_check
      _
    $region38: #{hamiltonian_nn_forward.1} parent=5 // pred_check_branch
      %192 = sbr.rel (%p189) target = $region40
    $region39: #{hamiltonian_nn_forward.1} parent=5 // pred_region
      %s193 = ssub.s32 %s11, 1
      %s194 = smul.u32 8, %s16
      %p195 = scmp.lt.s32.totalorder %s194, 31
      %s196 = scalar_select %p195, %s194, 31
      %s197 = smul.addr %s196, 8
      %s198 = scalar_lea.vmem %s0, %s197
      %p199 = pneg %p37
      %p200 = pneg %p34
      %p201 = pneg %p58
      %p202 = pneg %p55
      %p203 = pneg %p79
      %p204 = pneg %p76
      %p205 = pneg %p100
      %p206 = pneg %p97
      %p207 = pneg %p121
      %p208 = pneg %p118
      %p209 = pneg %p147
      %p210 = pneg %p144
      %s211 = smul.u32 8, %s16
      %p212 = scmp.lt.s32.totalorder %s211, 31
      %s213 = scalar_select %p212, %s211, 31
      %s214 = smul.addr %s213, 8
      %s215 = scalar_lea.vmem %s5, %s214
      %s216 = smul.u32 8, %s16
      %p217 = scmp.lt.s32.totalorder %s216, 31
      %s218 = scalar_select %p217, %s216, 31
      %s219 = smul.addr %s218, 8
      %s220 = scalar_lea.vmem %s0, %s219
      %s221 = smul.u32 8, %s16
      %s222 = smul.u32 8, %s16
      %p223 = scmp.lt.s32.totalorder %s222, 31
      %s224 = scalar_select %p223, %s222, 31
      %s225 = smul.addr %s224, 8
      %s226 = scalar_lea.vmem %s5, %s225
      %s227 = smul.u32 8, %s16
      %v228 = vld [vmem:[%s220] sm:$0xff]
      %v229 = vld [vmem:[%s220 + $0x8] sm:$0xff]
      %v230 = vld [vmem:[%s220 + $0x10] sm:$0xff]
      %v231 = vld [vmem:[%s220 + $0x18] sm:$0xff]
      %v232 = vld [vmem:[%s220 + $0x20] sm:$0xff]
      %v233 = vld [vmem:[%s220 + $0x28] sm:$0xff]
      %v234 = vld [vmem:[%s220 + $0x30] sm:$0xff]
      %v235 = vld [vmem:[%s220 + $0x38] sm:$0xff]
      %v236 = vld [vmem:[%s1] sm:$0xff]
      %v237 = vld [vmem:[%s1 + $0x8] sm:$0xff]
      %v238 = vld [vmem:[%s1 + $0x10] sm:$0xff]
      %v239 = vld [vmem:[%s1 + $0x18] sm:$0xff]
      %v240 = vld [vmem:[%s2] sm:$0x1]
      %v242 = vlaneseq
      %v243 = vshrl.u32 %v242, 7
      %v244 = vsub.s32 0, %v243
      %v245 = vrot.slane %v240, %v244
      %vm247 = vcmask 130048
      %v249 = vsel %vm247, %v228, 0
      %v252 = vsel %vm247, %v229, 0
      %v255 = vsel %vm247, %v230, 0
      %v258 = vsel %vm247, %v231, 0
      %v261 = vsel %vm247, %v232, 0
      %v264 = vsel %vm247, %v233, 0
      %v267 = vsel %vm247, %v234, 0
      %v270 = vsel %vm247, %v235, 0
      %v273 = vsel %vm247, %v236, 0
      %v276 = vsel %vm247, %v237, 0
      %v279 = vsel %vm247, %v238, 0
      %v282 = vsel %vm247, %v239, 0
      %284 = vmatprep.subr.mxu0 0.0
      %285 = vmatpush1.xpose.msra.mxu0 %v273
      %286 = vmatprep.subr.mxu0 0.0
      %287 = vmatpush1.xpose.msra.mxu0 %v276
      %288 = vmatprep.subr.mxu0 0.0
      %289 = vmatpush1.xpose.msra.mxu0 %v279
      %290 = vmatprep.subr.mxu0 0.0
      %291 = vmatpush1.xpose.msra.mxu0 %v282
      %292 = vmatprep.subr.mxu0 0.0
      %293 = vmatpush1.xpose.msra.mxu0 0.0
      %294 = vmatprep.subr.mxu0 0.0
      %295 = vmatpush1.xpose.msra.mxu0 0.0
      %296 = vmatprep.subr.mxu0 0.0
      %297 = vmatpush1.xpose.msra.mxu0 0.0
      %298 = vmatprep.subr.mxu0 0.0
      %299 = vmatpush1.xpose.msra.mxu0 0.0
      %300 = vmatprep.subr.mxu0 0.0
      %301 = vmatpush1.xpose.msra.mxu0 0.0
      %302 = vmatprep.subr.mxu0 0.0
      %303 = vmatpush1.xpose.msra.mxu0 0.0
      %304 = vmatprep.subr.mxu0 0.0
      %305 = vmatpush1.xpose.msra.mxu0 0.0
      %306 = vmatprep.subr.mxu0 0.0
      %307 = vmatpush1.xpose.msra.mxu0 0.0
      %308 = vmatprep.subr.mxu0 0.0
      %309 = vmatpush1.xpose.msra.mxu0 0.0
      %310 = vmatprep.subr.mxu0 0.0
      %311 = vmatpush1.xpose.msra.mxu0 0.0
      %312 = vmatprep.subr.mxu0 0.0
      %313 = vmatpush1.xpose.msra.mxu0 0.0
      %314 = vmatprep.subr.mxu0 0.0
      %315 = vmatpush1.xpose.msra.mxu0 0.0
      %316 = vmatprep.subr.mxu0 0.0
      %317 = vmatpush1.xpose.msra.mxu0 0.0
      %318 = vmatprep.subr.mxu0 0.0
      %319 = vmatpush1.xpose.msra.mxu0 0.0
      %320 = vmatprep.subr.mxu0 0.0
      %321 = vmatpush1.xpose.msra.mxu0 0.0
      %322 = vmatprep.subr.mxu0 0.0
      %323 = vmatpush1.xpose.msra.mxu0 0.0
      %324 = vmatprep.subr.mxu0 0.0
      %325 = vmatpush1.xpose.msra.mxu0 0.0
      %326 = vmatprep.subr.mxu0 0.0
      %327 = vmatpush1.xpose.msra.mxu0 0.0
      %328 = vmatprep.subr.mxu0 0.0
      %329 = vmatpush1.xpose.msra.mxu0 0.0
      %330 = vmatprep.subr.mxu0 0.0
      %331 = vmatpush1.xpose.msra.mxu0 0.0
      %332 = vmatprep.subr.mxu0 0.0
      %333 = vmatpush1.xpose.msra.mxu0 0.0
      %334 = vmatprep.subr.mxu0 0.0
      %335 = vmatpush1.xpose.msra.mxu0 0.0
      %336 = vmatprep.subr.mxu0 0.0
      %337 = vmatpush1.xpose.msra.mxu0 0.0
      %338 = vmatprep.subr.mxu0 0.0
      %339 = vmatpush1.xpose.msra.mxu0 0.0
      %340 = vmatprep.subr.mxu0 0.0
      %341 = vmatpush1.xpose.msra.mxu0 0.0
      %342 = vmatprep.subr.mxu0 0.0
      %343 = vmatpush1.xpose.msra.mxu0 0.0
      %344 = vmatprep.subr.mxu0 0.0
      %345 = vmatpush1.xpose.msra.mxu0 0.0
      %346 = vmatprep.subr.mxu0 0.0
      %347 = vmatpush1.xpose.msra.mxu0 0.0
      %348 = vmatprep.mubr.f32.mxu0 0.0
      %349 = vmatmul.mubr.f32.gmra.mrb[0].mxu0 %v249
      %v350 = vpop.f32.mrb[0].mxu0
      %v351 = vadd.f32 %v245, %v350
      %v352 = vpop.f32.mrb[0].mxu0
      %353 = vmatprep.mubr.f32.mxu0 0.0
      %354 = vmatmul.mubr.f32.gmra.mrb[0].mxu0 %v252
      %v355 = vpop.f32.mrb[0].mxu0
      %v356 = vadd.f32 %v245, %v355
      %v357 = vpop.f32.mrb[0].mxu0
      %358 = vmatprep.mubr.f32.mxu0 0.0
      %359 = vmatmul.mubr.f32.gmra.mrb[0].mxu0 %v255
      %v360 = vpop.f32.mrb[0].mxu0
      %v361 = vadd.f32 %v245, %v360
      %v362 = vpop.f32.mrb[0].mxu0
      %363 = vmatprep.mubr.f32.mxu0 0.0
      %364 = vmatmul.mubr.f32.gmra.mrb[0].mxu0 %v258
      %v365 = vpop.f32.mrb[0].mxu0
      %v366 = vadd.f32 %v245, %v365
      %v367 = vpop.f32.mrb[0].mxu0
      %368 = vmatprep.mubr.f32.mxu0 0.0
      %369 = vmatmul.mubr.f32.gmra.mrb[0].mxu0 %v261
      %v370 = vpop.f32.mrb[0].mxu0
      %v371 = vadd.f32 %v245, %v370
      %v372 = vpop.f32.mrb[0].mxu0
      %373 = vmatprep.mubr.f32.mxu0 0.0
      %374 = vmatmul.mubr.f32.gmra.mrb[0].mxu0 %v264
      %v375 = vpop.f32.mrb[0].mxu0
      %v376 = vadd.f32 %v245, %v375
      %v377 = vpop.f32.mrb[0].mxu0
      %378 = vmatprep.mubr.f32.mxu0 0.0
      %379 = vmatmul.mubr.f32.gmra.mrb[0].mxu0 %v267
      %v380 = vpop.f32.mrb[0].mxu0
      %v381 = vadd.f32 %v245, %v380
      %v382 = vpop.f32.mrb[0].mxu0
      %383 = vmatprep.mubr.f32.mxu0 0.0
      %384 = vmatmul.mubr.f32.gmra.mrb[0].mxu0 %v270
      %v385 = vpop.f32.mrb[0].mxu0
      %v386 = vadd.f32 %v245, %v385
      %v387 = vpop.f32.mrb[0].mxu0
      %388 = vdwg.mxu0
      %v389 = vtanh.pop %v351
      %v390 = vtanh.pop %v356
      %v391 = vtanh.pop %v361
      %v392 = vtanh.pop %v366
      %v393 = vtanh.pop %v371
      %v394 = vtanh.pop %v376
      %v395 = vtanh.pop %v381
      %v396 = vtanh.pop %v386
      %v397 = vmul.f32 %v389, %v389
      %v398 = vmul.f32 %v390, %v390
      %v399 = vmul.f32 %v391, %v391
      %v400 = vmul.f32 %v392, %v392
      %v401 = vmul.f32 %v393, %v393
      %v402 = vmul.f32 %v394, %v394
      %v403 = vmul.f32 %v395, %v395
      %v404 = vmul.f32 %v396, %v396
      %v405 = vsub.f32 1.0, %v397
      %v406 = vsub.f32 1.0, %v398
      %v407 = vsub.f32 1.0, %v399
      %v408 = vsub.f32 1.0, %v400
      %v409 = vsub.f32 1.0, %v401
      %v410 = vsub.f32 1.0, %v402
      %v411 = vsub.f32 1.0, %v403
      %v412 = vsub.f32 1.0, %v404
      %v413 = vld [vmem:[%s3] sm:$0x1]
      %v415 = vlaneseq
      %v416 = vshrl.u32 %v415, 7
      %v417 = vsub.s32 0, %v416
      %v418 = vrot.slane %v413, %v417
      %v420 = vmul.f32 %v405, %v418
      %v421 = vmul.f32 %v406, %v418
      %v422 = vmul.f32 %v407, %v418
      %v423 = vmul.f32 %v408, %v418
      %v424 = vmul.f32 %v409, %v418
      %v425 = vmul.f32 %v410, %v418
      %v426 = vmul.f32 %v411, %v418
      %v427 = vmul.f32 %v412, %v418
      %v428 = vld [vmem:[%s4] sm:$0xff]
      %v429 = vld [vmem:[%s4 + $0x8] sm:$0xff]
      %v430 = vld [vmem:[%s4 + $0x10] sm:$0xff]
      %v431 = vld [vmem:[%s4 + $0x18] sm:$0xff]
      %vm432 = vcmask 261120
      %v434 = vsel %vm432, %v420, 0
      %v437 = vsel %vm432, %v421, 0
      %v440 = vsel %vm432, %v422, 0
      %v443 = vsel %vm432, %v423, 0
      %v446 = vsel %vm432, %v424, 0
      %v449 = vsel %vm432, %v425, 0
      %v452 = vsel %vm432, %v426, 0
      %v455 = vsel %vm432, %v427, 0
      %457 = vmatprep.subr.mxu0 0.0
      %458 = vmatpush1.msra.mxu0 %v428
      %459 = vmatprep.subr.mxu0 0.0
      %460 = vmatpush1.msra.mxu0 %v429
      %461 = vmatprep.subr.mxu0 0.0
      %462 = vmatpush1.msra.mxu0 %v430
      %463 = vmatprep.subr.mxu0 0.0
      %464 = vmatpush1.msra.mxu0 %v431
      %465 = vmatprep.subr.mxu0 0.0
      %466 = vmatpush1.msra.mxu0 0.0
      %467 = vmatprep.subr.mxu0 0.0
      %468 = vmatpush1.msra.mxu0 0.0
      %469 = vmatprep.subr.mxu0 0.0
      %470 = vmatpush1.msra.mxu0 0.0
      %471 = vmatprep.subr.mxu0 0.0
      %472 = vmatpush1.msra.mxu0 0.0
      %473 = vmatprep.subr.mxu0 0.0
      %474 = vmatpush1.msra.mxu0 0.0
      %475 = vmatprep.subr.mxu0 0.0
      %476 = vmatpush1.msra.mxu0 0.0
      %477 = vmatprep.subr.mxu0 0.0
      %478 = vmatpush1.msra.mxu0 0.0
      %479 = vmatprep.subr.mxu0 0.0
      %480 = vmatpush1.msra.mxu0 0.0
      %481 = vmatprep.subr.mxu0 0.0
      %482 = vmatpush1.msra.mxu0 0.0
      %483 = vmatprep.subr.mxu0 0.0
      %484 = vmatpush1.msra.mxu0 0.0
      %485 = vmatprep.subr.mxu0 0.0
      %486 = vmatpush1.msra.mxu0 0.0
      %487 = vmatprep.subr.mxu0 0.0
      %488 = vmatpush1.msra.mxu0 0.0
      %489 = vmatprep.subr.mxu0 0.0
      %490 = vmatpush1.msra.mxu0 0.0
      %491 = vmatprep.subr.mxu0 0.0
      %492 = vmatpush1.msra.mxu0 0.0
      %493 = vmatprep.subr.mxu0 0.0
      %494 = vmatpush1.msra.mxu0 0.0
      %495 = vmatprep.subr.mxu0 0.0
      %496 = vmatpush1.msra.mxu0 0.0
      %497 = vmatprep.subr.mxu0 0.0
      %498 = vmatpush1.msra.mxu0 0.0
      %499 = vmatprep.subr.mxu0 0.0
      %500 = vmatpush1.msra.mxu0 0.0
      %501 = vmatprep.subr.mxu0 0.0
      %502 = vmatpush1.msra.mxu0 0.0
      %503 = vmatprep.subr.mxu0 0.0
      %504 = vmatpush1.msra.mxu0 0.0
      %505 = vmatprep.subr.mxu0 0.0
      %506 = vmatpush1.msra.mxu0 0.0
      %507 = vmatprep.subr.mxu0 0.0
      %508 = vmatpush1.msra.mxu0 0.0
      %509 = vmatprep.subr.mxu0 0.0
      %510 = vmatpush1.msra.mxu0 0.0
      %511 = vmatprep.subr.mxu0 0.0
      %512 = vmatpush1.msra.mxu0 0.0
      %513 = vmatprep.subr.mxu0 0.0
      %514 = vmatpush1.msra.mxu0 0.0
      %515 = vmatprep.subr.mxu0 0.0
      %516 = vmatpush1.msra.mxu0 0.0
      %517 = vmatprep.subr.mxu0 0.0
      %518 = vmatpush1.msra.mxu0 0.0
      %519 = vmatprep.subr.mxu0 0.0
      %520 = vmatpush1.msra.mxu0 0.0
      %521 = vmatprep.mubr.f32.mxu0 0.0
      %522 = vmatmul.mubr.f32.gmra.mrb[0].mxu0 %v434
      %v523 = vpop.f32.mrb[0].mxu0
      %v524 = vadd.f32 0.0, %v523
      %v525 = vpop.f32.mrb[0].mxu0
      %526 = vmatprep.mubr.f32.mxu0 0.0
      %527 = vmatmul.mubr.f32.gmra.mrb[0].mxu0 %v437
      %v528 = vpop.f32.mrb[0].mxu0
      %v529 = vadd.f32 0.0, %v528
      %v530 = vpop.f32.mrb[0].mxu0
      %531 = vmatprep.mubr.f32.mxu0 0.0
      %532 = vmatmul.mubr.f32.gmra.mrb[0].mxu0 %v440
      %v533 = vpop.f32.mrb[0].mxu0
      %v534 = vadd.f32 0.0, %v533
      %v535 = vpop.f32.mrb[0].mxu0
      %536 = vmatprep.mubr.f32.mxu0 0.0
      %537 = vmatmul.mubr.f32.gmra.mrb[0].mxu0 %v443
      %v538 = vpop.f32.mrb[0].mxu0
      %v539 = vadd.f32 0.0, %v538
      %v540 = vpop.f32.mrb[0].mxu0
      %541 = vmatprep.mubr.f32.mxu0 0.0
      %542 = vmatmul.mubr.f32.gmra.mrb[0].mxu0 %v446
      %v543 = vpop.f32.mrb[0].mxu0
      %v544 = vadd.f32 0.0, %v543
      %v545 = vpop.f32.mrb[0].mxu0
      %546 = vmatprep.mubr.f32.mxu0 0.0
      %547 = vmatmul.mubr.f32.gmra.mrb[0].mxu0 %v449
      %v548 = vpop.f32.mrb[0].mxu0
      %v549 = vadd.f32 0.0, %v548
      %v550 = vpop.f32.mrb[0].mxu0
      %551 = vmatprep.mubr.f32.mxu0 0.0
      %552 = vmatmul.mubr.f32.gmra.mrb[0].mxu0 %v452
      %v553 = vpop.f32.mrb[0].mxu0
      %v554 = vadd.f32 0.0, %v553
      %v555 = vpop.f32.mrb[0].mxu0
      %556 = vmatprep.mubr.f32.mxu0 0.0
      %557 = vmatmul.mubr.f32.gmra.mrb[0].mxu0 %v455
      %v558 = vpop.f32.mrb[0].mxu0
      %v559 = vadd.f32 0.0, %v558
      %v560 = vpop.f32.mrb[0].mxu0
      %561 = vdwg.mxu0
      %562 = vst.msk [vmem:[%s226] sm:$0xff] %vm247, %v524
      %563 = vst.msk [vmem:[%s226 + $0x8] sm:$0xff] %vm247, %v529
      %564 = vst.msk [vmem:[%s226 + $0x10] sm:$0xff] %vm247, %v534
      %565 = vst.msk [vmem:[%s226 + $0x18] sm:$0xff] %vm247, %v539
      %566 = vst.msk [vmem:[%s226 + $0x20] sm:$0xff] %vm247, %v544
      %567 = vst.msk [vmem:[%s226 + $0x28] sm:$0xff] %vm247, %v549
      %568 = vst.msk [vmem:[%s226 + $0x30] sm:$0xff] %vm247, %v554
      %569 = vst.msk [vmem:[%s226 + $0x38] sm:$0xff] %vm247, %v559
      %s570 = smul.u32 8, %s16
      %p571 = scmp.lt.s32.totalorder %s570, 31
      %s572 = scalar_select %p571, %s570, 31
      %s573 = smul.addr %s572, 8
      %s574 = scalar_lea.vmem %s5, %s573
      // Predicated region
      $region41: #{hamiltonian_nn_forward.1} parent=39 // pred_check
        %p575 = pneg %p144
      $region42: #{hamiltonian_nn_forward.1} parent=39 // pred_check_branch
        %577 = sbr.rel (%p575) target = $region44
      $region43: #{hamiltonian_nn_forward.1} parent=39 // pred_region
        %s578 = smul.u32 8, %s16
      $region44: #{hamiltonian_nn_forward.1} parent=39 // pred_fallthru
        _
    $region40: #{hamiltonian_nn_forward.1} parent=5 // pred_fallthru
      _
    %p579 = scmp.le.s32.totalorder 2, %s11
    // Predicated region
    $region45: #{hamiltonian_nn_forward.1} parent=5 // pred_check
      %p580 = pneg %p579
    $region46: #{hamiltonian_nn_forward.1} parent=5 // pred_check_branch
      %582 = sbr.rel (%p580) target = $region48
    $region47: #{hamiltonian_nn_forward.1} parent=5 // pred_region
      %s583 = ssub.s32 %s11, 2
      // Predicated region
      $region49: #{hamiltonian_nn_forward.1} parent=47 // pred_check
        %p584 = pneg %p150
      $region50: #{hamiltonian_nn_forward.1} parent=47 // pred_check_branch
        %586 = sbr.rel (%p584) target = $region52
      $region51: #{hamiltonian_nn_forward.1} parent=47 // pred_region
        %s587 = smul.u32 8, %s17
        %p588 = scmp.lt.s32.totalorder %s587, 31
        %s589 = scalar_select %p588, %s587, 31
        %s590 = smul.addr %s589, 8
        %s591 = scalar_lea.vmem %s5, %s590
      $region52: #{hamiltonian_nn_forward.1} parent=47 // pred_fallthru
        _
    $region48: #{hamiltonian_nn_forward.1} parent=5 // pred_fallthru
      _
  $region6: #{hamiltonian_nn_forward.1} parent=0 // loop_footer
    %s15 = sadd.s32 1, %s11
  $region7: #{hamiltonian_nn_forward.1} parent=0 // loop_footer_branch
    %10 = sbr.rel target = $region3
  $region8: #{hamiltonian_nn_forward.1} parent=0 // loop_exit
    _

</llo_original>
